<compile_context>
chip_gen: v7x
topology: tpu7x:2x2x1
jax: 0.10.0
libtpu: 0.0.40
codegen_flags: <defaults>
</compile_context>

<pallas_src>
import functools
import numpy as np
import jax
import jax.numpy as jnp
from jax.experimental import pallas as pl
from jax.experimental.pallas import tpu as pltpu

LANE = 128


def _round_up(x, m):
    return ((x + m - 1) // m) * m


# ----------------------------------------------------------------------------
# Mask generation (plain numpy, done once at parameter-setup time)
# ----------------------------------------------------------------------------
def generate_grid_weight_mask_predprey(image_size: int):
    P = image_size * image_size
    idx = np.arange(P)
    r, c = idx // image_size, idx % image_size
    weight_mask = (
        (np.abs(r[:, None] - r[None, :]) <= 1)
        & (np.abs(c[:, None] - c[None, :]) <= 1)
    ).astype(np.float32)
    diag_mask = np.eye(P, dtype=np.float32)
    return weight_mask, diag_mask


# ----------------------------------------------------------------------------
# Pallas kernel: fused recurrent propagation + decision MLP for one batch tile.
#   acts_ref : [bm, 2S] f32  = [ pred|prey (pad) || X|cave (pad) ]
#   w_ref    : [5, S, S] bf16 = [ wr_blockdiag, w1_h, w1_xcave, w2, w3_rows ]
#   v_ref    : [8, S]    f32  = [ diag(wi), bi, br, b1, b2, 0, 0, 0 ]
#   b3_ref   : [8, 1]    f32  (rows 0:2 = outputLayer3 bias)
#   out_ref  : [8, bm]   f32  (rows 0:2 meaningful, lane-major over batch)
# ----------------------------------------------------------------------------
def _forward_kernel(acts_ref, w_ref, v_ref, b3_ref, out_ref, *, layers: int,
                    P: int, S: int):
    f32, bf16 = jnp.float32, jnp.bfloat16

    acts = acts_ref[...]                    # [bm, 2S]
    seed = acts[:, 0:S]                     # [pred | prey | 0-pad]
    xc = acts[:, S:2 * S]                   # [X    | cave | 0-pad]

    v = v_ref[...]                          # single unmasked (8, S) load
    diag_wi = v[0:1]
    bi = v[1:2]
    br = v[2:3]
    b1 = v[3:4]
    b2 = v[4:5]

    wr = w_ref[0]        # block-diagonal recurrent weights (pred ⊕ prey), bf16
    w1_h = w_ref[1]      # decision layer-1, pred|prey rows
    w1_xc = w_ref[2]     # decision layer-1, cave rows (X rows are zero)
    w2t = w_ref[3]
    w3r = w_ref[4][0:8, :]   # [8, S]; rows 0:2 = outputLayer3 weights

    # Build xdup = [X | X | junk] in-kernel: XLU roll + VPU lane select.
    # Junk in lanes >= 2P is killed by diag_wi (zero there).
    lane = jax.lax.broadcasted_iota(jnp.int32, xc.shape, 1)
    xdup = jnp.where(lane < P, xc, pltpu.roll(xc, shift=P, axis=1))

    # Loop-invariant terms hoisted above the serial recurrent chain.
    drive_b = xdup * diag_wi + bi + br                      # Lin_in(X)+bi+br
    head_c = jnp.dot(xc.astype(bf16), w1_xc,
                     preferred_element_type=f32) + b1       # cave @ w1_c + b1

    # Input layer is identity(diag)-masked -> VPU elementwise, no MXU.
    h = jnp.maximum(seed * diag_wi + bi, 0.0)

    # Fused pred+prey recurrence: one [bm,S]@[S,S] MXU matmul per layer.
    for _ in range(layers):                 # static unrolled (layers is small)
        h = jnp.maximum(
            jnp.dot(h.astype(bf16), wr, preferred_element_type=f32) + drive_b,
            0.0,
        )

    # Decision head (H padded to S lanes; padding lanes stay exactly 0).
    h1 = jnp.tanh(jnp.dot(h.astype(bf16), w1_h, preferred_element_type=f32)
                  + head_c)
    h2 = jnp.tanh(jnp.dot(h1.astype(bf16), w2t, preferred_element_type=f32)
                  + b2)

    # Final layer emitted lane-major: out[o, b] = tanh(sum_h w3[o,h]*h2[b,h]+b3[o]).
    z = jax.lax.dot_general(w3r, h2.astype(bf16),
                            dimension_numbers=(((1,), (1,)), ((), ())),
                            preferred_element_type=f32)     # [8, bm]
    out_ref[...] = jnp.tanh(z + b3_ref[...])


def recurrent_shared_all_predprey(params, X, pred, prey, cave, *, layers,
                                  block_batch: int = 1024):
    """Forward pass. Returns [B, 2] like the PyTorch module."""
    B = X.shape[0]
    P, S = params["P"], params["S"]
    two_p = 2 * P

    # Batch tile: amortizes per-grid-step overhead & weight residency.
    # block_batch=1024 fits comfortably in scoped VMEM on v5e/v6e/v7x; raise it
    # (with pltpu.CompilerParams(vmem_limit_bytes=...)) for large-B throughput.
    bm = min(block_batch, _round_up(max(B, 1), 8))
    B_pad = _round_up(B, bm)

    # Single packed, lane-aligned activation slab: [pred|prey || X|cave].
    acts = jnp.zeros((B_pad, 2 * S), jnp.float32)
    acts = acts.at[:B, 0:two_p].set(jnp.concatenate([pred, prey], axis=1))
    acts = acts.at[:B, S:S + two_p].set(jnp.concatenate([X, cave], axis=1))

    out = pl.pallas_call(
        functools.partial(_forward_kernel, layers=layers, P=P, S=S),
        out_shape=jax.ShapeDtypeStruct((8, B_pad), jnp.float32),
        grid_spec=pltpu.PrefetchScalarGridSpec(
            num_scalar_prefetch=0,
            grid=(B_pad // bm,),
            in_specs=[
                pl.BlockSpec((bm, 2 * S), lambda i: (i, 0)),     # activations
                pl.BlockSpec((5, S, S), lambda i: (0, 0, 0)),    # weights (resident)
                pl.BlockSpec((8, S), lambda i: (0, 0)),          # biases/diag
                pl.BlockSpec((8, 1), lambda i: (0, 0)),          # b3 column
            ],
            out_specs=pl.BlockSpec((8, bm), lambda i: (0, i)),
        ),
        compiler_params=pltpu.CompilerParams(
            dimension_semantics=("parallel",)),
    )(acts, params["w_pack"], params["v_pack"], params["b3_col"])

    return out[0:2, 0:B].T                                   # [B, 2]


# ----------------------------------------------------------------------------
# Parameter construction (PyTorch-style uniform init + masks) and packing
# ----------------------------------------------------------------------------
def _linear(key, fan_in, fan_out):
    bound = 1.0 / np.sqrt(fan_in)
    kw, kb = jax.random.split(key)
    w = jax.random.uniform(kw, (fan_out, fan_in), jnp.float32, -bound, bound)
    b = jax.random.uniform(kb, (fan_out,), jnp.float32, -bound, bound)
    return w, b


def make_params(key, num_pixels, H_decision, image_size):
    weight_mask, diag_mask = generate_grid_weight_mask_predprey(image_size)
    weight_mask = jnp.asarray(weight_mask)
    diag_mask = jnp.asarray(diag_mask)

    ks = jax.random.split(key, 7)
    wi_pred, bi_pred = _linear(ks[0], num_pixels, num_pixels)
    wr_pred, br_pred = _linear(ks[1], num_pixels, num_pixels)
    wi_prey, bi_prey = _linear(ks[2], num_pixels, num_pixels)
    wr_prey, br_prey = _linear(ks[3], num_pixels, num_pixels)
    w1, b1 = _linear(ks[4], 3 * num_pixels, H_decision)
    w2, b2 = _linear(ks[5], H_decision, H_decision)
    w3, b3 = _linear(ks[6], H_decision, 2)

    # masked shared weights (as done in RepeatedLayersShared)
    wi_pred = wi_pred * diag_mask
    wr_pred = wr_pred * weight_mask
    wi_prey = wi_prey * diag_mask
    wr_prey = wr_prey * weight_mask

    P, H = num_pixels, H_decision
    two_p = 2 * P
    S = _round_up(two_p, LANE)          # lane-dense width, multiple of 128
    assert H <= S and 2 <= S, "decision width must fit the padded lane width"

    # Block-diagonal recurrent weight, pre-transposed to y = x @ W layout.
    wr_bd = (
        jnp.zeros((S, S), jnp.float32)
        .at[:P, :P].set(wr_pred.T)
        .at[P:two_p, P:two_p].set(wr_prey.T)
    )

    w1_t = w1.T  # [3P, H]
    w1_h = jnp.zeros((S, S), jnp.float32).at[:two_p, :H].set(w1_t[:two_p])
    # Cave rows placed at P:2P so the [X|cave] slab can be used directly
    # (X rows stay zero -> contribute nothing).
    w1_xc = jnp.zeros((S, S), jnp.float32).at[P:two_p, :H].set(w1_t[two_p:])
    w2_p = jnp.zeros((S, S), jnp.float32).at[:H, :H].set(w2.T)
    w3_p = jnp.zeros((S, S), jnp.float32).at[:2, :H].set(w3)   # row-major (not transposed)

    w_pack = jnp.stack([wr_bd, w1_h, w1_xc, w2_p, w3_p]).astype(jnp.bfloat16)

    v_pack = (
        jnp.zeros((8, S), jnp.float32)
        .at[0, :two_p].set(jnp.concatenate([jnp.diag(wi_pred), jnp.diag(wi_prey)]))
        .at[1, :two_p].set(jnp.concatenate([bi_pred, bi_prey]))
        .at[2, :two_p].set(jnp.concatenate([br_pred, br_prey]))
        .at[3, :H].set(b1)
        .at[4, :H].set(b2)
    )
    b3_col = jnp.zeros((8, 1), jnp.float32).at[:2, 0].set(b3)

    # unfused f32 copies for the pure-JAX reference
    ref = dict(
        wi_pred_t=wi_pred.T, bi_pred=bi_pred, wr_pred_t=wr_pred.T, br_pred=br_pred,
        wi_prey_t=wi_prey.T, bi_prey=bi_prey, wr_prey_t=wr_prey.T, br_prey=br_prey,
        w1_t=w1.T, b1=b1, w2_t=w2.T, b2=b2, w3_t=w3.T, b3=b3,
    )
    return {"w_pack": w_pack, "v_pack": v_pack, "b3_col": b3_col,
            "S": S, "P": P, "ref": ref}


# ----------------------------------------------------------------------------
# Pure-JAX reference (mirrors the PyTorch forward, full f32)
# ----------------------------------------------------------------------------
def reference_forward(params, X, pred, prey, cave, *, layers):
    r = params["ref"]

    def propagate(seed, wi_t, bi, wr_t, br):
        drive = X @ wi_t + bi
        h = jnp.maximum(seed @ wi_t + bi, 0.0)
        for _ in range(layers):
            h = jnp.maximum(h @ wr_t + br + drive, 0.0)
        return h

    pred_range = propagate(pred, r["wi_pred_t"], r["bi_pred"],
                           r["wr_pred_t"], r["br_pred"])
    prey_range = propagate(prey, r["wi_prey_t"], r["bi_prey"],
                           r["wr_prey_t"], r["br_prey"])
    tags = jnp.concatenate([pred_range, prey_range, cave], axis=1)
    h = jnp.tanh(tags @ r["w1_t"] + r["b1"])
    h = jnp.tanh(h @ r["w2_t"] + r["b2"])
    return jnp.tanh(h @ r["w3_t"] + r["b3"])


# ----------------------------------------------------------------------------
if __name__ == "__main__":
    IMAGE_SIZE = 8
    NUM_PIXELS = IMAGE_SIZE * IMAGE_SIZE      # 64
    LAYERS = 8
    H_DECISION = 32
    BATCH = 2

    key = jax.random.PRNGKey(0)
    k_params, k_x, k_pred, k_prey, k_cave = jax.random.split(key, 5)

    params = make_params(k_params, NUM_PIXELS, H_DECISION, IMAGE_SIZE)

    # inputs: occupancy-like maps over the flattened grid
    X = (jax.random.uniform(k_x, (BATCH, NUM_PIXELS)) > 0.5).astype(jnp.float32)
    pred = (jax.random.uniform(k_pred, (BATCH, NUM_PIXELS)) > 0.9).astype(jnp.float32)
    prey = (jax.random.uniform(k_prey, (BATCH, NUM_PIXELS)) > 0.9).astype(jnp.float32)
    cave = (jax.random.uniform(k_cave, (BATCH, NUM_PIXELS)) > 0.9).astype(jnp.float32)

    label = recurrent_shared_all_predprey(params, X, pred, prey, cave, layers=LAYERS)
    label = jax.block_until_ready(label)

    ref = reference_forward(params, X, pred, prey, cave, layers=LAYERS)
    assert label.shape == (BATCH, 2), label.shape
    assert np.all(np.isfinite(np.asarray(label)))
    # bf16 matmul operands vs f32 reference -> 2e-2 tolerance
    np.testing.assert_allclose(np.asarray(label), np.asarray(ref),
                               rtol=2e-2, atol=2e-2)

    print("KERNEL_OK")
</pallas_src>

<mosaic_0001>
module attributes {stable_mosaic.version = 11 : i64} {
  func.func @_forward_kernel(%arg0: i32, %arg1: memref<8x256xf32, #tpu.memory_space<vmem>>, %arg2: memref<5x128x128xbf16, #tpu.memory_space<vmem>>, %arg3: memref<8x128xf32, #tpu.memory_space<vmem>>, %arg4: memref<8x1xf32, #tpu.memory_space<vmem>>, %arg5: memref<8x8xf32, #tpu.memory_space<vmem>>) attributes {dimension_semantics = [#tpu.dimension_semantics<parallel>], iteration_bounds = array<i64: 1>, scalar_prefetch = 0 : i64, scratch_operands = 0 : i64, tpu.core_type = #tpu.core_type<tc>, window_params = [{transform_indices = @transform_0, window_bounds = array<i64: 8, 256>}, {pipeline_mode = #tpu.pipeline_mode<synchronous>, transform_indices = @transform_1, window_bounds = array<i64: 5, 128, 128>}, {pipeline_mode = #tpu.pipeline_mode<synchronous>, transform_indices = @transform_2, window_bounds = array<i64: 8, 128>}, {pipeline_mode = #tpu.pipeline_mode<synchronous>, transform_indices = @transform_3, window_bounds = array<i64: 8, 1>}, {transform_indices = @transform_4, window_bounds = array<i64: 8, 8>}]} {
    %c0 = arith.constant 0 : index
    %c0_0 = arith.constant 0 : index
    %0 = vector.load %arg1[%c0, %c0_0] : memref<8x256xf32, #tpu.memory_space<vmem>>, vector<8x256xf32>
    %1 = vector.extract_strided_slice %0 {offsets = [0, 0], sizes = [8, 128], strides = [1, 1]} : vector<8x256xf32> to vector<8x128xf32>
    %2 = vector.extract_strided_slice %0 {offsets = [0, 128], sizes = [8, 128], strides = [1, 1]} : vector<8x256xf32> to vector<8x128xf32>
    %c0_1 = arith.constant 0 : index
    %c0_2 = arith.constant 0 : index
    %3 = vector.load %arg3[%c0_1, %c0_2] : memref<8x128xf32, #tpu.memory_space<vmem>>, vector<8x128xf32>
    %4 = vector.extract_strided_slice %3 {offsets = [0, 0], sizes = [1, 128], strides = [1, 1]} : vector<8x128xf32> to vector<1x128xf32>
    %5 = vector.extract_strided_slice %3 {offsets = [1, 0], sizes = [1, 128], strides = [1, 1]} : vector<8x128xf32> to vector<1x128xf32>
    %6 = vector.extract_strided_slice %3 {offsets = [2, 0], sizes = [1, 128], strides = [1, 1]} : vector<8x128xf32> to vector<1x128xf32>
    %7 = vector.extract_strided_slice %3 {offsets = [3, 0], sizes = [1, 128], strides = [1, 1]} : vector<8x128xf32> to vector<1x128xf32>
    %8 = vector.extract_strided_slice %3 {offsets = [4, 0], sizes = [1, 128], strides = [1, 1]} : vector<8x128xf32> to vector<1x128xf32>
    %c0_3 = arith.constant 0 : index
    %c0_4 = arith.constant 0 : index
    %c0_5 = arith.constant 0 : index
    %9 = vector.load %arg2[%c0_3, %c0_4, %c0_5] : memref<5x128x128xbf16, #tpu.memory_space<vmem>>, vector<1x128x128xbf16>
    %10 = vector.shape_cast %9 : vector<1x128x128xbf16> to vector<128x128xbf16>
    %c1 = arith.constant 1 : index
    %c0_6 = arith.constant 0 : index
    %c0_7 = arith.constant 0 : index
    %11 = vector.load %arg2[%c1, %c0_6, %c0_7] : memref<5x128x128xbf16, #tpu.memory_space<vmem>>, vector<1x128x128xbf16>
    %12 = vector.shape_cast %11 : vector<1x128x128xbf16> to vector<128x128xbf16>
    %c2 = arith.constant 2 : index
    %c0_8 = arith.constant 0 : index
    %c0_9 = arith.constant 0 : index
    %13 = vector.load %arg2[%c2, %c0_8, %c0_9] : memref<5x128x128xbf16, #tpu.memory_space<vmem>>, vector<1x128x128xbf16>
    %14 = vector.shape_cast %13 : vector<1x128x128xbf16> to vector<128x128xbf16>
    %c3 = arith.constant 3 : index
    %c0_10 = arith.constant 0 : index
    %c0_11 = arith.constant 0 : index
    %15 = vector.load %arg2[%c3, %c0_10, %c0_11] : memref<5x128x128xbf16, #tpu.memory_space<vmem>>, vector<1x128x128xbf16>
    %16 = vector.shape_cast %15 : vector<1x128x128xbf16> to vector<128x128xbf16>
    %c4 = arith.constant 4 : index
    %c0_12 = arith.constant 0 : index
    %c0_13 = arith.constant 0 : index
    %17 = vector.load %arg2[%c4, %c0_12, %c0_13] : memref<5x128x128xbf16, #tpu.memory_space<vmem>>, vector<1x128x128xbf16>
    %18 = vector.shape_cast %17 : vector<1x128x128xbf16> to vector<128x128xbf16>
    %19 = vector.extract_strided_slice %18 {offsets = [0, 0], sizes = [8, 128], strides = [1, 1]} : vector<128x128xbf16> to vector<8x128xbf16>
    %20 = tpu.iota {dimensions = array<i32: 1>} : vector<8x128xi32>
    %c64_i32 = arith.constant 64 : i32
    %21 = vector.broadcast %c64_i32 : i32 to vector<8x128xi32>
    %22 = arith.cmpi slt, %20, %21 : vector<8x128xi32>
    %c64_i32_14 = arith.constant 64 : i32
    %23 = tpu.dynamic_rotate %2 by %c64_i32_14 dim 1 : vector<8x128xf32>, i32 -> vector<8x128xf32>
    %24 = arith.select %22, %2, %23 : vector<8x128xi1>, vector<8x128xf32>
    %25 = vector.broadcast %4 : vector<1x128xf32> to vector<8x128xf32>
    %26 = arith.mulf %24, %25 : vector<8x128xf32>
    %27 = vector.broadcast %5 : vector<1x128xf32> to vector<8x128xf32>
    %28 = arith.addf %26, %27 : vector<8x128xf32>
    %29 = vector.broadcast %6 : vector<1x128xf32> to vector<8x128xf32>
    %30 = arith.addf %28, %29 : vector<8x128xf32>
    %31 = arith.truncf %2 : vector<8x128xf32> to vector<8x128xbf16>
    %cst = arith.constant dense<0.000000e+00> : vector<8x128xf32>
    %32 = tpu.matmul %31, %14, %cst {dimension_numbers = #tpu.dot_dimension_numbers<[1], [0], [0], [1], [0, 0, 1, 1], [], []>} : vector<8x128xbf16>, vector<128x128xbf16>, vector<8x128xf32> -> vector<8x128xf32>
    %33 = vector.broadcast %7 : vector<1x128xf32> to vector<8x128xf32>
    %34 = arith.addf %32, %33 : vector<8x128xf32>
    %35 = vector.broadcast %4 : vector<1x128xf32> to vector<8x128xf32>
    %36 = arith.mulf %1, %35 : vector<8x128xf32>
    %37 = vector.broadcast %5 : vector<1x128xf32> to vector<8x128xf32>
    %38 = arith.addf %36, %37 : vector<8x128xf32>
    %cst_15 = arith.constant 0.000000e+00 : f32
    %39 = vector.broadcast %cst_15 : f32 to vector<8x128xf32>
    %40 = arith.maximumf %38, %39 : vector<8x128xf32>
    %41 = arith.truncf %40 : vector<8x128xf32> to vector<8x128xbf16>
    %cst_16 = arith.constant dense<0.000000e+00> : vector<8x128xf32>
    %42 = tpu.matmul %41, %10, %cst_16 {dimension_numbers = #tpu.dot_dimension_numbers<[1], [0], [0], [1], [0, 0, 1, 1], [], []>} : vector<8x128xbf16>, vector<128x128xbf16>, vector<8x128xf32> -> vector<8x128xf32>
    %43 = arith.addf %42, %30 : vector<8x128xf32>
    %cst_17 = arith.constant 0.000000e+00 : f32
    %44 = vector.broadcast %cst_17 : f32 to vector<8x128xf32>
    %45 = arith.maximumf %43, %44 : vector<8x128xf32>
    %46 = arith.truncf %45 : vector<8x128xf32> to vector<8x128xbf16>
    %cst_18 = arith.constant dense<0.000000e+00> : vector<8x128xf32>
    %47 = tpu.matmul %46, %10, %cst_18 {dimension_numbers = #tpu.dot_dimension_numbers<[1], [0], [0], [1], [0, 0, 1, 1], [], []>} : vector<8x128xbf16>, vector<128x128xbf16>, vector<8x128xf32> -> vector<8x128xf32>
    %48 = arith.addf %47, %30 : vector<8x128xf32>
    %cst_19 = arith.constant 0.000000e+00 : f32
    %49 = vector.broadcast %cst_19 : f32 to vector<8x128xf32>
    %50 = arith.maximumf %48, %49 : vector<8x128xf32>
    %51 = arith.truncf %50 : vector<8x128xf32> to vector<8x128xbf16>
    %cst_20 = arith.constant dense<0.000000e+00> : vector<8x128xf32>
    %52 = tpu.matmul %51, %10, %cst_20 {dimension_numbers = #tpu.dot_dimension_numbers<[1], [0], [0], [1], [0, 0, 1, 1], [], []>} : vector<8x128xbf16>, vector<128x128xbf16>, vector<8x128xf32> -> vector<8x128xf32>
    %53 = arith.addf %52, %30 : vector<8x128xf32>
    %cst_21 = arith.constant 0.000000e+00 : f32
    %54 = vector.broadcast %cst_21 : f32 to vector<8x128xf32>
    %55 = arith.maximumf %53, %54 : vector<8x128xf32>
    %56 = arith.truncf %55 : vector<8x128xf32> to vector<8x128xbf16>
    %cst_22 = arith.constant dense<0.000000e+00> : vector<8x128xf32>
    %57 = tpu.matmul %56, %10, %cst_22 {dimension_numbers = #tpu.dot_dimension_numbers<[1], [0], [0], [1], [0, 0, 1, 1], [], []>} : vector<8x128xbf16>, vector<128x128xbf16>, vector<8x128xf32> -> vector<8x128xf32>
    %58 = arith.addf %57, %30 : vector<8x128xf32>
    %cst_23 = arith.constant 0.000000e+00 : f32
    %59 = vector.broadcast %cst_23 : f32 to vector<8x128xf32>
    %60 = arith.maximumf %58, %59 : vector<8x128xf32>
    %61 = arith.truncf %60 : vector<8x128xf32> to vector<8x128xbf16>
    %cst_24 = arith.constant dense<0.000000e+00> : vector<8x128xf32>
    %62 = tpu.matmul %61, %10, %cst_24 {dimension_numbers = #tpu.dot_dimension_numbers<[1], [0], [0], [1], [0, 0, 1, 1], [], []>} : vector<8x128xbf16>, vector<128x128xbf16>, vector<8x128xf32> -> vector<8x128xf32>
    %63 = arith.addf %62, %30 : vector<8x128xf32>
    %cst_25 = arith.constant 0.000000e+00 : f32
    %64 = vector.broadcast %cst_25 : f32 to vector<8x128xf32>
    %65 = arith.maximumf %63, %64 : vector<8x128xf32>
    %66 = arith.truncf %65 : vector<8x128xf32> to vector<8x128xbf16>
    %cst_26 = arith.constant dense<0.000000e+00> : vector<8x128xf32>
    %67 = tpu.matmul %66, %10, %cst_26 {dimension_numbers = #tpu.dot_dimension_numbers<[1], [0], [0], [1], [0, 0, 1, 1], [], []>} : vector<8x128xbf16>, vector<128x128xbf16>, vector<8x128xf32> -> vector<8x128xf32>
    %68 = arith.addf %67, %30 : vector<8x128xf32>
    %cst_27 = arith.constant 0.000000e+00 : f32
    %69 = vector.broadcast %cst_27 : f32 to vector<8x128xf32>
    %70 = arith.maximumf %68, %69 : vector<8x128xf32>
    %71 = arith.truncf %70 : vector<8x128xf32> to vector<8x128xbf16>
    %cst_28 = arith.constant dense<0.000000e+00> : vector<8x128xf32>
    %72 = tpu.matmul %71, %10, %cst_28 {dimension_numbers = #tpu.dot_dimension_numbers<[1], [0], [0], [1], [0, 0, 1, 1], [], []>} : vector<8x128xbf16>, vector<128x128xbf16>, vector<8x128xf32> -> vector<8x128xf32>
    %73 = arith.addf %72, %30 : vector<8x128xf32>
    %cst_29 = arith.constant 0.000000e+00 : f32
    %74 = vector.broadcast %cst_29 : f32 to vector<8x128xf32>
    %75 = arith.maximumf %73, %74 : vector<8x128xf32>
    %76 = arith.truncf %75 : vector<8x128xf32> to vector<8x128xbf16>
    %cst_30 = arith.constant dense<0.000000e+00> : vector<8x128xf32>
    %77 = tpu.matmul %76, %10, %cst_30 {dimension_numbers = #tpu.dot_dimension_numbers<[1], [0], [0], [1], [0, 0, 1, 1], [], []>} : vector<8x128xbf16>, vector<128x128xbf16>, vector<8x128xf32> -> vector<8x128xf32>
    %78 = arith.addf %77, %30 : vector<8x128xf32>
    %cst_31 = arith.constant 0.000000e+00 : f32
    %79 = vector.broadcast %cst_31 : f32 to vector<8x128xf32>
    %80 = arith.maximumf %78, %79 : vector<8x128xf32>
    %81 = arith.truncf %80 : vector<8x128xf32> to vector<8x128xbf16>
    %cst_32 = arith.constant dense<0.000000e+00> : vector<8x128xf32>
    %82 = tpu.matmul %81, %12, %cst_32 {dimension_numbers = #tpu.dot_dimension_numbers<[1], [0], [0], [1], [0, 0, 1, 1], [], []>} : vector<8x128xbf16>, vector<128x128xbf16>, vector<8x128xf32> -> vector<8x128xf32>
    %83 = arith.addf %82, %34 : vector<8x128xf32>
    %84 = math.tanh %83 : vector<8x128xf32>
    %85 = arith.truncf %84 : vector<8x128xf32> to vector<8x128xbf16>
    %cst_33 = arith.constant dense<0.000000e+00> : vector<8x128xf32>
    %86 = tpu.matmul %85, %16, %cst_33 {dimension_numbers = #tpu.dot_dimension_numbers<[1], [0], [0], [1], [0, 0, 1, 1], [], []>} : vector<8x128xbf16>, vector<128x128xbf16>, vector<8x128xf32> -> vector<8x128xf32>
    %87 = vector.broadcast %8 : vector<1x128xf32> to vector<8x128xf32>
    %88 = arith.addf %86, %87 : vector<8x128xf32>
    %89 = math.tanh %88 : vector<8x128xf32>
    %90 = arith.truncf %89 : vector<8x128xf32> to vector<8x128xbf16>
    %cst_34 = arith.constant dense<0.000000e+00> : vector<8x8xf32>
    %91 = tpu.matmul %19, %90, %cst_34 {dimension_numbers = #tpu.dot_dimension_numbers<[1], [1], [0], [0], [0, 0, 1, 0], [], []>} : vector<8x128xbf16>, vector<8x128xbf16>, vector<8x8xf32> -> vector<8x8xf32>
    %c0_35 = arith.constant 0 : index
    %c0_36 = arith.constant 0 : index
    %92 = vector.load %arg4[%c0_35, %c0_36] : memref<8x1xf32, #tpu.memory_space<vmem>>, vector<8x1xf32>
    %93 = vector.broadcast %92 : vector<8x1xf32> to vector<8x8xf32>
    %94 = arith.addf %91, %93 : vector<8x8xf32>
    %95 = math.tanh %94 : vector<8x8xf32>
    %c0_37 = arith.constant 0 : index
    %c0_38 = arith.constant 0 : index
    %96 = vector.load %arg5[%c0_37, %c0_38] : memref<8x8xf32, #tpu.memory_space<vmem>>, vector<8x8xf32>
    tpu.vector_store %arg5[%c0_37, %c0_38], %95 {strides = array<i32>} : memref<8x8xf32, #tpu.memory_space<vmem>>, vector<8x8xf32>,
    return
  }
  func.func @transform_0(%arg0: i32) -> (i32, i32) {
    %c0_i32 = arith.constant 0 : i32
    %c0_i32_0 = arith.constant 0 : i32
    return %arg0, %c0_i32 : i32, i32
  }
  func.func @transform_1(%arg0: i32) -> (i32, i32, i32) {
    %c0_i32 = arith.constant 0 : i32
    %c0_i32_0 = arith.constant 0 : i32
    %c0_i32_1 = arith.constant 0 : i32
    %c0_i32_2 = arith.constant 0 : i32
    return %c0_i32, %c0_i32_0, %c0_i32_1 : i32, i32, i32
  }
  func.func @transform_2(%arg0: i32) -> (i32, i32) {
    %c0_i32 = arith.constant 0 : i32
    %c0_i32_0 = arith.constant 0 : i32
    %c0_i32_1 = arith.constant 0 : i32
    return %c0_i32, %c0_i32_0 : i32, i32
  }
  func.func @transform_3(%arg0: i32) -> (i32, i32) {
    %c0_i32 = arith.constant 0 : i32
    %c0_i32_0 = arith.constant 0 : i32
    %c0_i32_1 = arith.constant 0 : i32
    return %c0_i32, %c0_i32_0 : i32, i32
  }
  func.func @transform_4(%arg0: i32) -> (i32, i32) {
    %c0_i32 = arith.constant 0 : i32
    %c0_i32_0 = arith.constant 0 : i32
    return %c0_i32, %arg0 : i32, i32
  }
}

</mosaic_0001>

<llo_original>
// kernel: tpu_custom_call.1
$region0: #{tpu_custom_call.1}
  #allocation0 [shape = 'u32[]', space=smem, size = 0x4, offset = 0x4, fixed_abs, tag = 'smem constant byte address 0x4 - core index']
  #allocation1 [shape = 'u32[144,128]{1,0:T(1,128)}', space=vmem, size = 0x12000, scoped, tag = 'internal scratch']
  %s0 = inlined_call_operand.hbm [shape: f32[8,256], index: 0, kind: input, shape index: {}]
  %s1 = inlined_call_operand.hbm [shape: bf16[5,128,128], index: 1, kind: input, shape index: {}]
  %s2 = inlined_call_operand.vmem [shape: f32[8,128], index: 2, kind: input, shape index: {}]
  %s3 = inlined_call_operand.vmem [shape: f32[8,1], index: 3, kind: input, shape index: {}]
  %s4 = inlined_call_operand.hbm [shape: f32[8,8], index: 4, kind: output, shape index: {}]
  %s5 = sld [smem:[#allocation0]]
  $region34: #{tpu_custom_call.1} parent=0
    _
  %s7 = ssub.s32 1, %s5
  %s8 = scalar_select 0, %s7, %s5
  $region1: #{tpu_custom_call.1} parent=0
    #allocation2 [shape = 'u8[8192]{0}', space=vmem, size = 0x2000, scoped, tag = 'input window, operand 0, single buffered']
    #allocation3 [shape = 's32[1]{0}', space=sflag, size = 0x4, scoped, tag = 'scoped memory for tpu_custom_call.1']
    #allocation4 [shape = 's32[1]{0}', space=sflag, size = 0x4, scoped, tag = 'scoped memory for tpu_custom_call.1']
    #allocation5 [shape = 'u8[163840]{0}', space=vmem, size = 0x28000, scoped, tag = 'input window, operand 1, single buffered']
    #allocation6 [shape = 's32[1]{0}', space=sflag, size = 0x4, scoped, tag = 'scoped memory for tpu_custom_call.1']
    #allocation7 [shape = 'u8[4096]{0}', space=vmem, size = 0x1000, scoped, tag = 'output window, operand 0, single buffered']
    %9 = vsyncpa [#allocation3], 0
    %10 = vsyncpa [#allocation6], 0
    %11 = vsyncpa [#allocation4], 0
    // Predicated region
    $region2: #{tpu_custom_call.1} parent=1 // pred_check
      _
    $region3: #{tpu_custom_call.1} parent=1 // pred_check_branch
      %13 = sbr.rel (0) target = $region5
    $region4: #{tpu_custom_call.1} parent=1 // pred_region
      %s15 = ssub.s32 256, 256
      %16 = vsyncadd [#allocation3], %s15
      %s18 = sshll.u32 [#allocation2], 4
      %s19 = int_to_ptr.vmem [resolvable:$true] %s18
      %21 = dma.hbm_to_vmem [thread:$0]  %s0, 256, %s19, [#allocation3]
    $region5: #{tpu_custom_call.1} parent=1 // pred_fallthru
      _
    // Predicated region
    $region6: #{tpu_custom_call.1} parent=1 // pred_check
      _
    $region7: #{tpu_custom_call.1} parent=1 // pred_check_branch
      %23 = sbr.rel (0) target = $region9
    $region8: #{tpu_custom_call.1} parent=1 // pred_region
      %s25 = ssub.s32 5120, 5120
      %26 = vsyncadd [#allocation6], %s25
      %s27 = sshll.u32 [#allocation5], 4
      %s28 = int_to_ptr.vmem [resolvable:$true] %s27
      %33 = dma.hbm_to_vmem [thread:$0]  %s1, 5120, %s28, [#allocation6], 64, 64, 4
    $region9: #{tpu_custom_call.1} parent=1 // pred_fallthru
      _
    // Predicated region
    $region10: #{tpu_custom_call.1} parent=1 // pred_check
      _
    $region11: #{tpu_custom_call.1} parent=1 // pred_check_branch
      %35 = sbr.rel (0) target = $region13
    $region12: #{tpu_custom_call.1} parent=1 // pred_region
      _
    $region13: #{tpu_custom_call.1} parent=1 // pred_fallthru
      _
    // Predicated region
    $region14: #{tpu_custom_call.1} parent=1 // pred_check
      _
    $region15: #{tpu_custom_call.1} parent=1 // pred_check_branch
      %37 = sbr.rel (0) target = $region17
    $region16: #{tpu_custom_call.1} parent=1 // pred_region
      _
    $region17: #{tpu_custom_call.1} parent=1 // pred_fallthru
      _
    // Predicated region
    $region18: #{tpu_custom_call.1} parent=1 // pred_check
      _
    $region19: #{tpu_custom_call.1} parent=1 // pred_check_branch
      %39 = sbr.rel (0) target = $region21
    $region20: #{tpu_custom_call.1} parent=1 // pred_region
      %40 = dma.done [#allocation3], 256
    $region21: #{tpu_custom_call.1} parent=1 // pred_fallthru
      _
    // Predicated region
    $region22: #{tpu_custom_call.1} parent=1 // pred_check
      _
    $region23: #{tpu_custom_call.1} parent=1 // pred_check_branch
      %42 = sbr.rel (0) target = $region25
    $region24: #{tpu_custom_call.1} parent=1 // pred_region
      %43 = dma.done [#allocation6], 5120
    $region25: #{tpu_custom_call.1} parent=1 // pred_fallthru
      _
    %v45 = vld [vmem:[#allocation2] sm:$0xff]
    %v46 = vld [vmem:[#allocation2 + $0x8] sm:$0xff]
    %v47 = vld [vmem:[%s2] sm:$0xff]
    %v48 = vld [vmem:[#allocation5] sm:$0xf]
    %v49 = vld [vmem:[#allocation5 + $0x4] sm:$0xf]
    %v50 = vld [vmem:[#allocation5 + $0x8] sm:$0xf]
    %v51 = vld [vmem:[#allocation5 + $0xc] sm:$0xf]
    %v52 = vld [vmem:[#allocation5 + $0x10] sm:$0xf]
    %v53 = vld [vmem:[#allocation5 + $0x14] sm:$0xf]
    %v54 = vld [vmem:[#allocation5 + $0x18] sm:$0xf]
    %v55 = vld [vmem:[#allocation5 + $0x1c] sm:$0xf]
    %v56 = vld [vmem:[#allocation5 + $0x20] sm:$0xf]
    %v57 = vld [vmem:[#allocation5 + $0x24] sm:$0xf]
    %v58 = vld [vmem:[#allocation5 + $0x28] sm:$0xf]
    %v59 = vld [vmem:[#allocation5 + $0x2c] sm:$0xf]
    %v60 = vld [vmem:[#allocation5 + $0x30] sm:$0xf]
    %v61 = vld [vmem:[#allocation5 + $0x34] sm:$0xf]
    %v62 = vld [vmem:[#allocation5 + $0x38] sm:$0xf]
    %v63 = vld [vmem:[#allocation5 + $0x3c] sm:$0xf]
    %s64 = scalar_lea.vmem [#allocation5], 64
    %v65 = vld [vmem:[%s64] sm:$0xf]
    %v66 = vld [vmem:[%s64 + $0x4] sm:$0xf]
    %v67 = vld [vmem:[%s64 + $0x8] sm:$0xf]
    %v68 = vld [vmem:[%s64 + $0xc] sm:$0xf]
    %v69 = vld [vmem:[%s64 + $0x10] sm:$0xf]
    %v70 = vld [vmem:[%s64 + $0x14] sm:$0xf]
    %v71 = vld [vmem:[%s64 + $0x18] sm:$0xf]
    %v72 = vld [vmem:[%s64 + $0x1c] sm:$0xf]
    %v73 = vld [vmem:[%s64 + $0x20] sm:$0xf]
    %v74 = vld [vmem:[%s64 + $0x24] sm:$0xf]
    %v75 = vld [vmem:[%s64 + $0x28] sm:$0xf]
    %v76 = vld [vmem:[%s64 + $0x2c] sm:$0xf]
    %v77 = vld [vmem:[%s64 + $0x30] sm:$0xf]
    %v78 = vld [vmem:[%s64 + $0x34] sm:$0xf]
    %v79 = vld [vmem:[%s64 + $0x38] sm:$0xf]
    %v80 = vld [vmem:[%s64 + $0x3c] sm:$0xf]
    %s81 = scalar_lea.vmem [#allocation5], 128
    %v82 = vld [vmem:[%s81] sm:$0xf]
    %v83 = vld [vmem:[%s81 + $0x4] sm:$0xf]
    %v84 = vld [vmem:[%s81 + $0x8] sm:$0xf]
    %v85 = vld [vmem:[%s81 + $0xc] sm:$0xf]
    %v86 = vld [vmem:[%s81 + $0x10] sm:$0xf]
    %v87 = vld [vmem:[%s81 + $0x14] sm:$0xf]
    %v88 = vld [vmem:[%s81 + $0x18] sm:$0xf]
    %v89 = vld [vmem:[%s81 + $0x1c] sm:$0xf]
    %v90 = vld [vmem:[%s81 + $0x20] sm:$0xf]
    %v91 = vld [vmem:[%s81 + $0x24] sm:$0xf]
    %v92 = vld [vmem:[%s81 + $0x28] sm:$0xf]
    %v93 = vld [vmem:[%s81 + $0x2c] sm:$0xf]
    %v94 = vld [vmem:[%s81 + $0x30] sm:$0xf]
    %v95 = vld [vmem:[%s81 + $0x34] sm:$0xf]
    %v96 = vld [vmem:[%s81 + $0x38] sm:$0xf]
    %v97 = vld [vmem:[%s81 + $0x3c] sm:$0xf]
    %s98 = scalar_lea.vmem [#allocation5], 192
    %v99 = vld [vmem:[%s98] sm:$0xf]
    %v100 = vld [vmem:[%s98 + $0x4] sm:$0xf]
    %v101 = vld [vmem:[%s98 + $0x8] sm:$0xf]
    %v102 = vld [vmem:[%s98 + $0xc] sm:$0xf]
    %v103 = vld [vmem:[%s98 + $0x10] sm:$0xf]
    %v104 = vld [vmem:[%s98 + $0x14] sm:$0xf]
    %v105 = vld [vmem:[%s98 + $0x18] sm:$0xf]
    %v106 = vld [vmem:[%s98 + $0x1c] sm:$0xf]
    %v107 = vld [vmem:[%s98 + $0x20] sm:$0xf]
    %v108 = vld [vmem:[%s98 + $0x24] sm:$0xf]
    %v109 = vld [vmem:[%s98 + $0x28] sm:$0xf]
    %v110 = vld [vmem:[%s98 + $0x2c] sm:$0xf]
    %v111 = vld [vmem:[%s98 + $0x30] sm:$0xf]
    %v112 = vld [vmem:[%s98 + $0x34] sm:$0xf]
    %v113 = vld [vmem:[%s98 + $0x38] sm:$0xf]
    %v114 = vld [vmem:[%s98 + $0x3c] sm:$0xf]
    %s115 = scalar_lea.vmem [#allocation5], 256
    %v116 = vld [vmem:[%s115] sm:$0xf]
    %v117 = vlaneseq
    %v118 = vand.u32 %v117, 127
    %vm119 = vcmp.lt.s32.totalorder %v118, 64
    %120 = vrot.lane.b32.xlu0 %v46, 64
    %v121 = vpop.permute.xlu0 %120
    %v122 = vsel %vm119, %v46, %v121
    %v123 = vlaneseq
    %v124 = vshrl.u32 %v123, 7
    %v125 = vsub.s32 0, %v124
    %v126 = vrot.slane %v47, %v125
    %v127 = vmul.f32 %v122, %v126
    %v128 = vlaneseq
    %v129 = vshrl.u32 %v128, 7
    %v130 = vsub.s32 1, %v129
    %v131 = vrot.slane %v47, %v130
    %v132 = vadd.f32 %v127, %v131
    %v133 = vlaneseq
    %v134 = vshrl.u32 %v133, 7
    %v135 = vsub.s32 2, %v134
    %v136 = vrot.slane %v47, %v135
    %v137 = vadd.f32 %v132, %v136
    %v138 = vpack.c.bf16 %v46, %v46
    %v139 = vlaneseq
    %v140 = vshrl.u32 %v139, 7
    %v141 = vsub.s32 3, %v140
    %v142 = vrot.slane %v47, %v141
    %v159 = vunpack.c.l.b16 %v82
    %v160 = vunpack.c.l.b16 %v83
    %v161 = vunpack.c.l.b16 %v84
    %v162 = vunpack.c.l.b16 %v85
    %v163 = vunpack.c.l.b16 %v86
    %v164 = vunpack.c.l.b16 %v87
    %v165 = vunpack.c.l.b16 %v88
    %v166 = vunpack.c.l.b16 %v89
    %v167 = vunpack.c.l.b16 %v90
    %v168 = vunpack.c.l.b16 %v91
    %v169 = vunpack.c.l.b16 %v92
    %v170 = vunpack.c.l.b16 %v93
    %v171 = vunpack.c.l.b16 %v94
    %v172 = vunpack.c.l.b16 %v95
    %v173 = vunpack.c.l.b16 %v96
    %v174 = vunpack.c.l.b16 %v97
    %v175 = vpack.c.b16 %v160, %v159
    %v176 = vpack.c.b16 %v162, %v161
    %v177 = vpack.c.b16 %v164, %v163
    %v178 = vpack.c.b16 %v166, %v165
    %v179 = vpack.c.b16 %v168, %v167
    %v180 = vpack.c.b16 %v170, %v169
    %v181 = vpack.c.b16 %v172, %v171
    %v182 = vpack.c.b16 %v174, %v173
    %191 = vmatprep.subr.bf16.mxu0 0
    %192 = vmatpush1.bf16.msra.mxu0 %v175
    %193 = vmatprep.subr.bf16.mxu0 0
    %194 = vmatpush1.bf16.msra.mxu0 %v176
    %195 = vmatprep.subr.bf16.mxu0 0
    %196 = vmatpush1.bf16.msra.mxu0 %v177
    %197 = vmatprep.subr.bf16.mxu0 0
    %198 = vmatpush1.bf16.msra.mxu0 %v178
    %199 = vmatprep.subr.bf16.mxu0 0
    %200 = vmatpush1.bf16.msra.mxu0 %v179
    %201 = vmatprep.subr.bf16.mxu0 0
    %202 = vmatpush1.bf16.msra.mxu0 %v180
    %203 = vmatprep.subr.bf16.mxu0 0
    %204 = vmatpush1.bf16.msra.mxu0 %v181
    %205 = vmatprep.subr.bf16.mxu0 0
    %206 = vmatpush1.bf16.msra.mxu0 %v182
    %207 = vmatprep.subr.bf16.mxu0 0
    %208 = vmatpush1.bf16.msra.mxu0 0
    %209 = vmatprep.subr.bf16.mxu0 0
    %210 = vmatpush1.bf16.msra.mxu0 0
    %211 = vmatprep.subr.bf16.mxu0 0
    %212 = vmatpush1.bf16.msra.mxu0 0
    %213 = vmatprep.subr.bf16.mxu0 0
    %214 = vmatpush1.bf16.msra.mxu0 0
    %215 = vmatprep.subr.bf16.mxu0 0
    %216 = vmatpush1.bf16.msra.mxu0 0
    %217 = vmatprep.subr.bf16.mxu0 0
    %218 = vmatpush1.bf16.msra.mxu0 0
    %219 = vmatprep.subr.bf16.mxu0 0
    %220 = vmatpush1.bf16.msra.mxu0 0
    %221 = vmatprep.subr.bf16.mxu0 0
    %222 = vmatpush1.bf16.msra.mxu0 0
    %223 = vmatprep.mubr.bf16.mxu0 0
    %224 = vmatmul.mubr.bf16.gmra.mrb[0].mxu0 %v138
    %v225 = vpop.f32.mrb[0].mxu0
    %v226 = vadd.f32 %v142, %v225
    %v227 = vpop.f32.mrb[0].mxu0
    %v228 = vpop.f32.mrb[0].mxu0
    %v229 = vpop.f32.mrb[0].mxu0
    %230 = vdwg.mxu0
    %v231 = vmul.f32 %v45, %v126
    %v232 = vadd.f32 %v231, %v131
    %v233 = vmax.f32 %v232, 0.0
    %v234 = vpack.c.bf16 %v233, %v233
    %v251 = vunpack.c.l.b16 %v48
    %v252 = vunpack.c.l.b16 %v49
    %v253 = vunpack.c.l.b16 %v50
    %v254 = vunpack.c.l.b16 %v51
    %v255 = vunpack.c.l.b16 %v52
    %v256 = vunpack.c.l.b16 %v53
    %v257 = vunpack.c.l.b16 %v54
    %v258 = vunpack.c.l.b16 %v55
    %v259 = vunpack.c.l.b16 %v56
    %v260 = vunpack.c.l.b16 %v57
    %v261 = vunpack.c.l.b16 %v58
    %v262 = vunpack.c.l.b16 %v59
    %v263 = vunpack.c.l.b16 %v60
    %v264 = vunpack.c.l.b16 %v61
    %v265 = vunpack.c.l.b16 %v62
    %v266 = vunpack.c.l.b16 %v63
    %v267 = vpack.c.b16 %v252, %v251
    %v268 = vpack.c.b16 %v254, %v253
    %v269 = vpack.c.b16 %v256, %v255
    %v270 = vpack.c.b16 %v258, %v257
    %v271 = vpack.c.b16 %v260, %v259
    %v272 = vpack.c.b16 %v262, %v261
    %v273 = vpack.c.b16 %v264, %v263
    %v274 = vpack.c.b16 %v266, %v265
    %283 = vmatprep.subr.bf16.mxu0 0
    %284 = vmatpush1.bf16.msra.mxu0 %v267
    %285 = vmatprep.subr.bf16.mxu0 0
    %286 = vmatpush1.bf16.msra.mxu0 %v268
    %287 = vmatprep.subr.bf16.mxu0 0
    %288 = vmatpush1.bf16.msra.mxu0 %v269
    %289 = vmatprep.subr.bf16.mxu0 0
    %290 = vmatpush1.bf16.msra.mxu0 %v270
    %291 = vmatprep.subr.bf16.mxu0 0
    %292 = vmatpush1.bf16.msra.mxu0 %v271
    %293 = vmatprep.subr.bf16.mxu0 0
    %294 = vmatpush1.bf16.msra.mxu0 %v272
    %295 = vmatprep.subr.bf16.mxu0 0
    %296 = vmatpush1.bf16.msra.mxu0 %v273
    %297 = vmatprep.subr.bf16.mxu0 0
    %298 = vmatpush1.bf16.msra.mxu0 %v274
    %299 = vmatprep.subr.bf16.mxu0 0
    %300 = vmatpush1.bf16.msra.mxu0 0
    %301 = vmatprep.subr.bf16.mxu0 0
    %302 = vmatpush1.bf16.msra.mxu0 0
    %303 = vmatprep.subr.bf16.mxu0 0
    %304 = vmatpush1.bf16.msra.mxu0 0
    %305 = vmatprep.subr.bf16.mxu0 0
    %306 = vmatpush1.bf16.msra.mxu0 0
    %307 = vmatprep.subr.bf16.mxu0 0
    %308 = vmatpush1.bf16.msra.mxu0 0
    %309 = vmatprep.subr.bf16.mxu0 0
    %310 = vmatpush1.bf16.msra.mxu0 0
    %311 = vmatprep.subr.bf16.mxu0 0
    %312 = vmatpush1.bf16.msra.mxu0 0
    %313 = vmatprep.subr.bf16.mxu0 0
    %314 = vmatpush1.bf16.msra.mxu0 0
    %315 = vmatprep.mubr.bf16.mxu0 0
    %316 = vmatmul.mubr.bf16.gmra.mrb[0].mxu0 %v234
    %v317 = vpop.f32.mrb[0].mxu0
    %v318 = vadd.f32 %v137, %v317
    %v319 = vpop.f32.mrb[0].mxu0
    %v320 = vpop.f32.mrb[0].mxu0
    %v321 = vpop.f32.mrb[0].mxu0
    %322 = vdwg.mxu0
    %v323 = vmax.f32 %v318, 0.0
    %v324 = vpack.c.bf16 %v323, %v323
    %325 = vmatprep.subr.bf16.mxu0 0
    %326 = vmatpush1.bf16.msra.mxu0 %v267
    %327 = vmatprep.subr.bf16.mxu0 0
    %328 = vmatpush1.bf16.msra.mxu0 %v268
    %329 = vmatprep.subr.bf16.mxu0 0
    %330 = vmatpush1.bf16.msra.mxu0 %v269
    %331 = vmatprep.subr.bf16.mxu0 0
    %332 = vmatpush1.bf16.msra.mxu0 %v270
    %333 = vmatprep.subr.bf16.mxu0 0
    %334 = vmatpush1.bf16.msra.mxu0 %v271
    %335 = vmatprep.subr.bf16.mxu0 0
    %336 = vmatpush1.bf16.msra.mxu0 %v272
    %337 = vmatprep.subr.bf16.mxu0 0
    %338 = vmatpush1.bf16.msra.mxu0 %v273
    %339 = vmatprep.subr.bf16.mxu0 0
    %340 = vmatpush1.bf16.msra.mxu0 %v274
    %341 = vmatprep.subr.bf16.mxu0 0
    %342 = vmatpush1.bf16.msra.mxu0 0
    %343 = vmatprep.subr.bf16.mxu0 0
    %344 = vmatpush1.bf16.msra.mxu0 0
    %345 = vmatprep.subr.bf16.mxu0 0
    %346 = vmatpush1.bf16.msra.mxu0 0
    %347 = vmatprep.subr.bf16.mxu0 0
    %348 = vmatpush1.bf16.msra.mxu0 0
    %349 = vmatprep.subr.bf16.mxu0 0
    %350 = vmatpush1.bf16.msra.mxu0 0
    %351 = vmatprep.subr.bf16.mxu0 0
    %352 = vmatpush1.bf16.msra.mxu0 0
    %353 = vmatprep.subr.bf16.mxu0 0
    %354 = vmatpush1.bf16.msra.mxu0 0
    %355 = vmatprep.subr.bf16.mxu0 0
    %356 = vmatpush1.bf16.msra.mxu0 0
    %357 = vmatprep.mubr.bf16.mxu0 0
    %358 = vmatmul.mubr.bf16.gmra.mrb[0].mxu0 %v324
    %v359 = vpop.f32.mrb[0].mxu0
    %v360 = vadd.f32 %v137, %v359
    %v361 = vpop.f32.mrb[0].mxu0
    %v362 = vpop.f32.mrb[0].mxu0
    %v363 = vpop.f32.mrb[0].mxu0
    %364 = vdwg.mxu0
    %v365 = vmax.f32 %v360, 0.0
    %v366 = vpack.c.bf16 %v365, %v365
    %367 = vmatprep.subr.bf16.mxu0 0
    %368 = vmatpush1.bf16.msra.mxu0 %v267
    %369 = vmatprep.subr.bf16.mxu0 0
    %370 = vmatpush1.bf16.msra.mxu0 %v268
    %371 = vmatprep.subr.bf16.mxu0 0
    %372 = vmatpush1.bf16.msra.mxu0 %v269
    %373 = vmatprep.subr.bf16.mxu0 0
    %374 = vmatpush1.bf16.msra.mxu0 %v270
    %375 = vmatprep.subr.bf16.mxu0 0
    %376 = vmatpush1.bf16.msra.mxu0 %v271
    %377 = vmatprep.subr.bf16.mxu0 0
    %378 = vmatpush1.bf16.msra.mxu0 %v272
    %379 = vmatprep.subr.bf16.mxu0 0
    %380 = vmatpush1.bf16.msra.mxu0 %v273
    %381 = vmatprep.subr.bf16.mxu0 0
    %382 = vmatpush1.bf16.msra.mxu0 %v274
    %383 = vmatprep.subr.bf16.mxu0 0
    %384 = vmatpush1.bf16.msra.mxu0 0
    %385 = vmatprep.subr.bf16.mxu0 0
    %386 = vmatpush1.bf16.msra.mxu0 0
    %387 = vmatprep.subr.bf16.mxu0 0
    %388 = vmatpush1.bf16.msra.mxu0 0
    %389 = vmatprep.subr.bf16.mxu0 0
    %390 = vmatpush1.bf16.msra.mxu0 0
    %391 = vmatprep.subr.bf16.mxu0 0
    %392 = vmatpush1.bf16.msra.mxu0 0
    %393 = vmatprep.subr.bf16.mxu0 0
    %394 = vmatpush1.bf16.msra.mxu0 0
    %395 = vmatprep.subr.bf16.mxu0 0
    %396 = vmatpush1.bf16.msra.mxu0 0
    %397 = vmatprep.subr.bf16.mxu0 0
    %398 = vmatpush1.bf16.msra.mxu0 0
    %399 = vmatprep.mubr.bf16.mxu0 0
    %400 = vmatmul.mubr.bf16.gmra.mrb[0].mxu0 %v366
    %v401 = vpop.f32.mrb[0].mxu0
    %v402 = vadd.f32 %v137, %v401
    %v403 = vpop.f32.mrb[0].mxu0
    %v404 = vpop.f32.mrb[0].mxu0
    %v405 = vpop.f32.mrb[0].mxu0
    %406 = vdwg.mxu0
    %v407 = vmax.f32 %v402, 0.0
    %v408 = vpack.c.bf16 %v407, %v407
    %409 = vmatprep.subr.bf16.mxu0 0
    %410 = vmatpush1.bf16.msra.mxu0 %v267
    %411 = vmatprep.subr.bf16.mxu0 0
    %412 = vmatpush1.bf16.msra.mxu0 %v268
    %413 = vmatprep.subr.bf16.mxu0 0
    %414 = vmatpush1.bf16.msra.mxu0 %v269
    %415 = vmatprep.subr.bf16.mxu0 0
    %416 = vmatpush1.bf16.msra.mxu0 %v270
    %417 = vmatprep.subr.bf16.mxu0 0
    %418 = vmatpush1.bf16.msra.mxu0 %v271
    %419 = vmatprep.subr.bf16.mxu0 0
    %420 = vmatpush1.bf16.msra.mxu0 %v272
    %421 = vmatprep.subr.bf16.mxu0 0
    %422 = vmatpush1.bf16.msra.mxu0 %v273
    %423 = vmatprep.subr.bf16.mxu0 0
    %424 = vmatpush1.bf16.msra.mxu0 %v274
    %425 = vmatprep.subr.bf16.mxu0 0
    %426 = vmatpush1.bf16.msra.mxu0 0
    %427 = vmatprep.subr.bf16.mxu0 0
    %428 = vmatpush1.bf16.msra.mxu0 0
    %429 = vmatprep.subr.bf16.mxu0 0
    %430 = vmatpush1.bf16.msra.mxu0 0
    %431 = vmatprep.subr.bf16.mxu0 0
    %432 = vmatpush1.bf16.msra.mxu0 0
    %433 = vmatprep.subr.bf16.mxu0 0
    %434 = vmatpush1.bf16.msra.mxu0 0
    %435 = vmatprep.subr.bf16.mxu0 0
    %436 = vmatpush1.bf16.msra.mxu0 0
    %437 = vmatprep.subr.bf16.mxu0 0
    %438 = vmatpush1.bf16.msra.mxu0 0
    %439 = vmatprep.subr.bf16.mxu0 0
    %440 = vmatpush1.bf16.msra.mxu0 0
    %441 = vmatprep.mubr.bf16.mxu0 0
    %442 = vmatmul.mubr.bf16.gmra.mrb[0].mxu0 %v408
    %v443 = vpop.f32.mrb[0].mxu0
    %v444 = vadd.f32 %v137, %v443
    %v445 = vpop.f32.mrb[0].mxu0
    %v446 = vpop.f32.mrb[0].mxu0
    %v447 = vpop.f32.mrb[0].mxu0
    %448 = vdwg.mxu0
    %v449 = vmax.f32 %v444, 0.0
    %v450 = vpack.c.bf16 %v449, %v449
    %451 = vmatprep.subr.bf16.mxu0 0
    %452 = vmatpush1.bf16.msra.mxu0 %v267
    %453 = vmatprep.subr.bf16.mxu0 0
    %454 = vmatpush1.bf16.msra.mxu0 %v268
    %455 = vmatprep.subr.bf16.mxu0 0
    %456 = vmatpush1.bf16.msra.mxu0 %v269
    %457 = vmatprep.subr.bf16.mxu0 0
    %458 = vmatpush1.bf16.msra.mxu0 %v270
    %459 = vmatprep.subr.bf16.mxu0 0
    %460 = vmatpush1.bf16.msra.mxu0 %v271
    %461 = vmatprep.subr.bf16.mxu0 0
    %462 = vmatpush1.bf16.msra.mxu0 %v272
    %463 = vmatprep.subr.bf16.mxu0 0
    %464 = vmatpush1.bf16.msra.mxu0 %v273
    %465 = vmatprep.subr.bf16.mxu0 0
    %466 = vmatpush1.bf16.msra.mxu0 %v274
    %467 = vmatprep.subr.bf16.mxu0 0
    %468 = vmatpush1.bf16.msra.mxu0 0
    %469 = vmatprep.subr.bf16.mxu0 0
    %470 = vmatpush1.bf16.msra.mxu0 0
    %471 = vmatprep.subr.bf16.mxu0 0
    %472 = vmatpush1.bf16.msra.mxu0 0
    %473 = vmatprep.subr.bf16.mxu0 0
    %474 = vmatpush1.bf16.msra.mxu0 0
    %475 = vmatprep.subr.bf16.mxu0 0
    %476 = vmatpush1.bf16.msra.mxu0 0
    %477 = vmatprep.subr.bf16.mxu0 0
    %478 = vmatpush1.bf16.msra.mxu0 0
    %479 = vmatprep.subr.bf16.mxu0 0
    %480 = vmatpush1.bf16.msra.mxu0 0
    %481 = vmatprep.subr.bf16.mxu0 0
    %482 = vmatpush1.bf16.msra.mxu0 0
    %483 = vmatprep.mubr.bf16.mxu0 0
    %484 = vmatmul.mubr.bf16.gmra.mrb[0].mxu0 %v450
    %v485 = vpop.f32.mrb[0].mxu0
    %v486 = vadd.f32 %v137, %v485
    %v487 = vpop.f32.mrb[0].mxu0
    %v488 = vpop.f32.mrb[0].mxu0
    %v489 = vpop.f32.mrb[0].mxu0
    %490 = vdwg.mxu0
    %v491 = vmax.f32 %v486, 0.0
    %v492 = vpack.c.bf16 %v491, %v491
    %493 = vmatprep.subr.bf16.mxu0 0
    %494 = vmatpush1.bf16.msra.mxu0 %v267
    %495 = vmatprep.subr.bf16.mxu0 0
    %496 = vmatpush1.bf16.msra.mxu0 %v268
    %497 = vmatprep.subr.bf16.mxu0 0
    %498 = vmatpush1.bf16.msra.mxu0 %v269
    %499 = vmatprep.subr.bf16.mxu0 0
    %500 = vmatpush1.bf16.msra.mxu0 %v270
    %501 = vmatprep.subr.bf16.mxu0 0
    %502 = vmatpush1.bf16.msra.mxu0 %v271
    %503 = vmatprep.subr.bf16.mxu0 0
    %504 = vmatpush1.bf16.msra.mxu0 %v272
    %505 = vmatprep.subr.bf16.mxu0 0
    %506 = vmatpush1.bf16.msra.mxu0 %v273
    %507 = vmatprep.subr.bf16.mxu0 0
    %508 = vmatpush1.bf16.msra.mxu0 %v274
    %509 = vmatprep.subr.bf16.mxu0 0
    %510 = vmatpush1.bf16.msra.mxu0 0
    %511 = vmatprep.subr.bf16.mxu0 0
    %512 = vmatpush1.bf16.msra.mxu0 0
    %513 = vmatprep.subr.bf16.mxu0 0
    %514 = vmatpush1.bf16.msra.mxu0 0
    %515 = vmatprep.subr.bf16.mxu0 0
    %516 = vmatpush1.bf16.msra.mxu0 0
    %517 = vmatprep.subr.bf16.mxu0 0
    %518 = vmatpush1.bf16.msra.mxu0 0
    %519 = vmatprep.subr.bf16.mxu0 0
    %520 = vmatpush1.bf16.msra.mxu0 0
    %521 = vmatprep.subr.bf16.mxu0 0
    %522 = vmatpush1.bf16.msra.mxu0 0
    %523 = vmatprep.subr.bf16.mxu0 0
    %524 = vmatpush1.bf16.msra.mxu0 0
    %525 = vmatprep.mubr.bf16.mxu0 0
    %526 = vmatmul.mubr.bf16.gmra.mrb[0].mxu0 %v492
    %v527 = vpop.f32.mrb[0].mxu0
    %v528 = vadd.f32 %v137, %v527
    %v529 = vpop.f32.mrb[0].mxu0
    %v530 = vpop.f32.mrb[0].mxu0
    %v531 = vpop.f32.mrb[0].mxu0
    %532 = vdwg.mxu0
    %v533 = vmax.f32 %v528, 0.0
    %v534 = vpack.c.bf16 %v533, %v533
    %535 = vmatprep.subr.bf16.mxu0 0
    %536 = vmatpush1.bf16.msra.mxu0 %v267
    %537 = vmatprep.subr.bf16.mxu0 0
    %538 = vmatpush1.bf16.msra.mxu0 %v268
    %539 = vmatprep.subr.bf16.mxu0 0
    %540 = vmatpush1.bf16.msra.mxu0 %v269
    %541 = vmatprep.subr.bf16.mxu0 0
    %542 = vmatpush1.bf16.msra.mxu0 %v270
    %543 = vmatprep.subr.bf16.mxu0 0
    %544 = vmatpush1.bf16.msra.mxu0 %v271
    %545 = vmatprep.subr.bf16.mxu0 0
    %546 = vmatpush1.bf16.msra.mxu0 %v272
    %547 = vmatprep.subr.bf16.mxu0 0
    %548 = vmatpush1.bf16.msra.mxu0 %v273
    %549 = vmatprep.subr.bf16.mxu0 0
    %550 = vmatpush1.bf16.msra.mxu0 %v274
    %551 = vmatprep.subr.bf16.mxu0 0
    %552 = vmatpush1.bf16.msra.mxu0 0
    %553 = vmatprep.subr.bf16.mxu0 0
    %554 = vmatpush1.bf16.msra.mxu0 0
    %555 = vmatprep.subr.bf16.mxu0 0
    %556 = vmatpush1.bf16.msra.mxu0 0
    %557 = vmatprep.subr.bf16.mxu0 0
    %558 = vmatpush1.bf16.msra.mxu0 0
    %559 = vmatprep.subr.bf16.mxu0 0
    %560 = vmatpush1.bf16.msra.mxu0 0
    %561 = vmatprep.subr.bf16.mxu0 0
    %562 = vmatpush1.bf16.msra.mxu0 0
    %563 = vmatprep.subr.bf16.mxu0 0
    %564 = vmatpush1.bf16.msra.mxu0 0
    %565 = vmatprep.subr.bf16.mxu0 0
    %566 = vmatpush1.bf16.msra.mxu0 0
    %567 = vmatprep.mubr.bf16.mxu0 0
    %568 = vmatmul.mubr.bf16.gmra.mrb[0].mxu0 %v534
    %v569 = vpop.f32.mrb[0].mxu0
    %v570 = vadd.f32 %v137, %v569
    %v571 = vpop.f32.mrb[0].mxu0
    %v572 = vpop.f32.mrb[0].mxu0
    %v573 = vpop.f32.mrb[0].mxu0
    %574 = vdwg.mxu0
    %v575 = vmax.f32 %v570, 0.0
    %v576 = vpack.c.bf16 %v575, %v575
    %577 = vmatprep.subr.bf16.mxu0 0
    %578 = vmatpush1.bf16.msra.mxu0 %v267
    %579 = vmatprep.subr.bf16.mxu0 0
    %580 = vmatpush1.bf16.msra.mxu0 %v268
    %581 = vmatprep.subr.bf16.mxu0 0
    %582 = vmatpush1.bf16.msra.mxu0 %v269
    %583 = vmatprep.subr.bf16.mxu0 0
    %584 = vmatpush1.bf16.msra.mxu0 %v270
    %585 = vmatprep.subr.bf16.mxu0 0
    %586 = vmatpush1.bf16.msra.mxu0 %v271
    %587 = vmatprep.subr.bf16.mxu0 0
    %588 = vmatpush1.bf16.msra.mxu0 %v272
    %589 = vmatprep.subr.bf16.mxu0 0
    %590 = vmatpush1.bf16.msra.mxu0 %v273
    %591 = vmatprep.subr.bf16.mxu0 0
    %592 = vmatpush1.bf16.msra.mxu0 %v274
    %593 = vmatprep.subr.bf16.mxu0 0
    %594 = vmatpush1.bf16.msra.mxu0 0
    %595 = vmatprep.subr.bf16.mxu0 0
    %596 = vmatpush1.bf16.msra.mxu0 0
    %597 = vmatprep.subr.bf16.mxu0 0
    %598 = vmatpush1.bf16.msra.mxu0 0
    %599 = vmatprep.subr.bf16.mxu0 0
    %600 = vmatpush1.bf16.msra.mxu0 0
    %601 = vmatprep.subr.bf16.mxu0 0
    %602 = vmatpush1.bf16.msra.mxu0 0
    %603 = vmatprep.subr.bf16.mxu0 0
    %604 = vmatpush1.bf16.msra.mxu0 0
    %605 = vmatprep.subr.bf16.mxu0 0
    %606 = vmatpush1.bf16.msra.mxu0 0
    %607 = vmatprep.subr.bf16.mxu0 0
    %608 = vmatpush1.bf16.msra.mxu0 0
    %609 = vmatprep.mubr.bf16.mxu0 0
    %610 = vmatmul.mubr.bf16.gmra.mrb[0].mxu0 %v576
    %v611 = vpop.f32.mrb[0].mxu0
    %v612 = vadd.f32 %v137, %v611
    %v613 = vpop.f32.mrb[0].mxu0
    %v614 = vpop.f32.mrb[0].mxu0
    %v615 = vpop.f32.mrb[0].mxu0
    %616 = vdwg.mxu0
    %v617 = vmax.f32 %v612, 0.0
    %v618 = vpack.c.bf16 %v617, %v617
    %v635 = vunpack.c.l.b16 %v65
    %v636 = vunpack.c.l.b16 %v66
    %v637 = vunpack.c.l.b16 %v67
    %v638 = vunpack.c.l.b16 %v68
    %v639 = vunpack.c.l.b16 %v69
    %v640 = vunpack.c.l.b16 %v70
    %v641 = vunpack.c.l.b16 %v71
    %v642 = vunpack.c.l.b16 %v72
    %v643 = vunpack.c.l.b16 %v73
    %v644 = vunpack.c.l.b16 %v74
    %v645 = vunpack.c.l.b16 %v75
    %v646 = vunpack.c.l.b16 %v76
    %v647 = vunpack.c.l.b16 %v77
    %v648 = vunpack.c.l.b16 %v78
    %v649 = vunpack.c.l.b16 %v79
    %v650 = vunpack.c.l.b16 %v80
    %v651 = vpack.c.b16 %v636, %v635
    %v652 = vpack.c.b16 %v638, %v637
    %v653 = vpack.c.b16 %v640, %v639
    %v654 = vpack.c.b16 %v642, %v641
    %v655 = vpack.c.b16 %v644, %v643
    %v656 = vpack.c.b16 %v646, %v645
    %v657 = vpack.c.b16 %v648, %v647
    %v658 = vpack.c.b16 %v650, %v649
    %667 = vmatprep.subr.bf16.mxu0 0
    %668 = vmatpush1.bf16.msra.mxu0 %v651
    %669 = vmatprep.subr.bf16.mxu0 0
    %670 = vmatpush1.bf16.msra.mxu0 %v652
    %671 = vmatprep.subr.bf16.mxu0 0
    %672 = vmatpush1.bf16.msra.mxu0 %v653
    %673 = vmatprep.subr.bf16.mxu0 0
    %674 = vmatpush1.bf16.msra.mxu0 %v654
    %675 = vmatprep.subr.bf16.mxu0 0
    %676 = vmatpush1.bf16.msra.mxu0 %v655
    %677 = vmatprep.subr.bf16.mxu0 0
    %678 = vmatpush1.bf16.msra.mxu0 %v656
    %679 = vmatprep.subr.bf16.mxu0 0
    %680 = vmatpush1.bf16.msra.mxu0 %v657
    %681 = vmatprep.subr.bf16.mxu0 0
    %682 = vmatpush1.bf16.msra.mxu0 %v658
    %683 = vmatprep.subr.bf16.mxu0 0
    %684 = vmatpush1.bf16.msra.mxu0 0
    %685 = vmatprep.subr.bf16.mxu0 0
    %686 = vmatpush1.bf16.msra.mxu0 0
    %687 = vmatprep.subr.bf16.mxu0 0
    %688 = vmatpush1.bf16.msra.mxu0 0
    %689 = vmatprep.subr.bf16.mxu0 0
    %690 = vmatpush1.bf16.msra.mxu0 0
    %691 = vmatprep.subr.bf16.mxu0 0
    %692 = vmatpush1.bf16.msra.mxu0 0
    %693 = vmatprep.subr.bf16.mxu0 0
    %694 = vmatpush1.bf16.msra.mxu0 0
    %695 = vmatprep.subr.bf16.mxu0 0
    %696 = vmatpush1.bf16.msra.mxu0 0
    %697 = vmatprep.subr.bf16.mxu0 0
    %698 = vmatpush1.bf16.msra.mxu0 0
    %699 = vmatprep.mubr.bf16.mxu0 0
    %700 = vmatmul.mubr.bf16.gmra.mrb[0].mxu0 %v618
    %v701 = vpop.f32.mrb[0].mxu0
    %v702 = vadd.f32 %v226, %v701
    %v703 = vpop.f32.mrb[0].mxu0
    %v704 = vpop.f32.mrb[0].mxu0
    %v705 = vpop.f32.mrb[0].mxu0
    %706 = vdwg.mxu0
    %v707 = vtanh.pop %v702
    %v708 = vpack.c.bf16 %v707, %v707
    %v709 = vlaneseq
    %v710 = vshrl.u32 %v709, 7
    %v711 = vsub.s32 4, %v710
    %v712 = vrot.slane %v47, %v711
    %v729 = vunpack.c.l.b16 %v99
    %v730 = vunpack.c.l.b16 %v100
    %v731 = vunpack.c.l.b16 %v101
    %v732 = vunpack.c.l.b16 %v102
    %v733 = vunpack.c.l.b16 %v103
    %v734 = vunpack.c.l.b16 %v104
    %v735 = vunpack.c.l.b16 %v105
    %v736 = vunpack.c.l.b16 %v106
    %v737 = vunpack.c.l.b16 %v107
    %v738 = vunpack.c.l.b16 %v108
    %v739 = vunpack.c.l.b16 %v109
    %v740 = vunpack.c.l.b16 %v110
    %v741 = vunpack.c.l.b16 %v111
    %v742 = vunpack.c.l.b16 %v112
    %v743 = vunpack.c.l.b16 %v113
    %v744 = vunpack.c.l.b16 %v114
    %v745 = vpack.c.b16 %v730, %v729
    %v746 = vpack.c.b16 %v732, %v731
    %v747 = vpack.c.b16 %v734, %v733
    %v748 = vpack.c.b16 %v736, %v735
    %v749 = vpack.c.b16 %v738, %v737
    %v750 = vpack.c.b16 %v740, %v739
    %v751 = vpack.c.b16 %v742, %v741
    %v752 = vpack.c.b16 %v744, %v743
    %761 = vmatprep.subr.bf16.mxu0 0
    %762 = vmatpush1.bf16.msra.mxu0 %v745
    %763 = vmatprep.subr.bf16.mxu0 0
    %764 = vmatpush1.bf16.msra.mxu0 %v746
    %765 = vmatprep.subr.bf16.mxu0 0
    %766 = vmatpush1.bf16.msra.mxu0 %v747
    %767 = vmatprep.subr.bf16.mxu0 0
    %768 = vmatpush1.bf16.msra.mxu0 %v748
    %769 = vmatprep.subr.bf16.mxu0 0
    %770 = vmatpush1.bf16.msra.mxu0 %v749
    %771 = vmatprep.subr.bf16.mxu0 0
    %772 = vmatpush1.bf16.msra.mxu0 %v750
    %773 = vmatprep.subr.bf16.mxu0 0
    %774 = vmatpush1.bf16.msra.mxu0 %v751
    %775 = vmatprep.subr.bf16.mxu0 0
    %776 = vmatpush1.bf16.msra.mxu0 %v752
    %777 = vmatprep.subr.bf16.mxu0 0
    %778 = vmatpush1.bf16.msra.mxu0 0
    %779 = vmatprep.subr.bf16.mxu0 0
    %780 = vmatpush1.bf16.msra.mxu0 0
    %781 = vmatprep.subr.bf16.mxu0 0
    %782 = vmatpush1.bf16.msra.mxu0 0
    %783 = vmatprep.subr.bf16.mxu0 0
    %784 = vmatpush1.bf16.msra.mxu0 0
    %785 = vmatprep.subr.bf16.mxu0 0
    %786 = vmatpush1.bf16.msra.mxu0 0
    %787 = vmatprep.subr.bf16.mxu0 0
    %788 = vmatpush1.bf16.msra.mxu0 0
    %789 = vmatprep.subr.bf16.mxu0 0
    %790 = vmatpush1.bf16.msra.mxu0 0
    %791 = vmatprep.subr.bf16.mxu0 0
    %792 = vmatpush1.bf16.msra.mxu0 0
    %793 = vmatprep.mubr.bf16.mxu0 0
    %794 = vmatmul.mubr.bf16.gmra.mrb[0].mxu0 %v708
    %v795 = vpop.f32.mrb[0].mxu0
    %v796 = vadd.f32 %v712, %v795
    %v797 = vpop.f32.mrb[0].mxu0
    %v798 = vpop.f32.mrb[0].mxu0
    %v799 = vpop.f32.mrb[0].mxu0
    %800 = vdwg.mxu0
    %v801 = vtanh.pop %v796
    %v802 = vpack.c.bf16 %v801, %v801
    %v803 = vld [vmem:[%s3] sm:$0xff]
    %805 = vset.pattern.permute.xlu0 0
    %806 = vperm.xlu0 %805, %v803
    %v807 = vpop.permute.xlu0 %806
    %809 = vmatprep.subr.bf16.mxu0 0
    %810 = vmatpush1.bf16.xpose.msra.mxu0 %v802
    %811 = vmatprep.subr.bf16.mxu0 0
    %812 = vmatpush1.bf16.xpose.msra.mxu0 0
    %813 = vmatprep.subr.bf16.mxu0 0
    %814 = vmatpush1.bf16.xpose.msra.mxu0 0
    %815 = vmatprep.subr.bf16.mxu0 0
    %816 = vmatpush1.bf16.xpose.msra.mxu0 0
    %817 = vmatprep.subr.bf16.mxu0 0
    %818 = vmatpush1.bf16.xpose.msra.mxu0 0
    %819 = vmatprep.subr.bf16.mxu0 0
    %820 = vmatpush1.bf16.xpose.msra.mxu0 0
    %821 = vmatprep.subr.bf16.mxu0 0
    %822 = vmatpush1.bf16.xpose.msra.mxu0 0
    %823 = vmatprep.subr.bf16.mxu0 0
    %824 = vmatpush1.bf16.xpose.msra.mxu0 0
    %825 = vmatprep.subr.bf16.mxu0 0
    %826 = vmatpush1.bf16.xpose.msra.mxu0 0
    %827 = vmatprep.subr.bf16.mxu0 0
    %828 = vmatpush1.bf16.xpose.msra.mxu0 0
    %829 = vmatprep.subr.bf16.mxu0 0
    %830 = vmatpush1.bf16.xpose.msra.mxu0 0
    %831 = vmatprep.subr.bf16.mxu0 0
    %832 = vmatpush1.bf16.xpose.msra.mxu0 0
    %833 = vmatprep.subr.bf16.mxu0 0
    %834 = vmatpush1.bf16.xpose.msra.mxu0 0
    %835 = vmatprep.subr.bf16.mxu0 0
    %836 = vmatpush1.bf16.xpose.msra.mxu0 0
    %837 = vmatprep.subr.bf16.mxu0 0
    %838 = vmatpush1.bf16.xpose.msra.mxu0 0
    %839 = vmatprep.subr.bf16.mxu0 0
    %840 = vmatpush1.bf16.xpose.msra.mxu0 0
    %841 = vmatprep.mubr.bf16.mxu0 0
    %842 = vmatmul.mubr.bf16.gmra.mrb[0].mxu0 %v116
    %v843 = vpop.f32.mrb[0].mxu0
    %v844 = vadd.f32 %v807, %v843
    %v845 = vpop.f32.mrb[0].mxu0
    %v846 = vpop.f32.mrb[0].mxu0
    %v847 = vpop.f32.mrb[0].mxu0
    %848 = vdwg.mxu0
    %v849 = vtanh.pop %v844
    %vm850 = vcmask 64512
    %851 = vst.msk [vmem:[#allocation7] sm:$0xff] %vm850, %v849
    // Predicated region
    $region26: #{tpu_custom_call.1} parent=1 // pred_check
      _
    $region27: #{tpu_custom_call.1} parent=1 // pred_check_branch
      %853 = sbr.rel (0) target = $region29
    $region28: #{tpu_custom_call.1} parent=1 // pred_region
      %s855 = ssub.s32 128, 128
      %856 = vsyncadd [#allocation4], %s855
      %s858 = sshll.u32 [#allocation7], 4
      %s859 = int_to_ptr.vmem [resolvable:$true] %s858
      %861 = dma.vmem_to_hbm [thread:$0]  %s859, 128, %s4, [#allocation4]
    $region29: #{tpu_custom_call.1} parent=1 // pred_fallthru
      _
    // Predicated region
    $region30: #{tpu_custom_call.1} parent=1 // pred_check
      _
    $region31: #{tpu_custom_call.1} parent=1 // pred_check_branch
      %863 = sbr.rel (0) target = $region33
    $region32: #{tpu_custom_call.1} parent=1 // pred_region
      %864 = dma.done [#allocation4], 128
    $region33: #{tpu_custom_call.1} parent=1 // pred_fallthru
      _
    %865 = vsyncpa [#allocation3], 1
    %866 = vsyncpa [#allocation6], 1
    %867 = vsyncpa [#allocation4], 1

</llo_original>
